<compile_context>
chip_gen: v7x
topology: tpu7x:2x2x1
jax: 0.10.0
libtpu: 0.0.40
codegen_flags: <defaults>
</compile_context>

<pallas_src>
import functools

import jax
import jax.numpy as jnp
from jax import lax
from jax.experimental import pallas as pl
from jax.experimental.pallas import tpu as pltpu


def _round_up(x: int, m: int) -> int:
    return (x + m - 1) // m * m


def _sublane_multiple(dtype) -> int:
    itemsize = jnp.dtype(dtype).itemsize
    return max(8, 32 // itemsize)  # 8 for f32, 16 for bf16, 32 for int8


def _lora_linear_kernel(x_ref, w_ref, b_ref, a_ref, bl_ref, o_ref,
                        acc_ref, down_ref, *, scaling, reuse_down):
    # x_ref   : (tm, tk)     input row/K tile
    # w_ref   : (tn, tk)     base weight, native (out, in) tile
    # b_ref   : (1, tn)      base bias tile
    # a_ref   : (rank, tk)   lora_A, native (rank, in) tile
    # bl_ref  : (tn, rank)   lora_B, native (out, rank) tile
    # o_ref   : (tm, tn)     output tile
    # acc_ref : (tm, tn)  f32 base-path accumulator (persists across K)
    # down_ref: (tm, rank) f32 LoRA down-projection accumulator
    #           (persists across K, and across the whole j sweep if reuse_down)
    j = pl.program_id(1)
    k = pl.program_id(2)
    contract_last = (((1,), (1,)), ((), ()))  # contract dim 1 of both operands

    @pl.when(k == 0)
    def _():
        acc_ref[...] = jnp.zeros_like(acc_ref)

    x = x_ref[...]

    # Base path partial: x_tile (tm,tk) . W_tile (tn,tk) -> (tm,tn), f32 acc.
    # (Issued first so v7x can accumulate in the MXU result buffer in place.)
    acc_ref[...] += lax.dot_general(x, w_ref[...], contract_last,
                                    preferred_element_type=jnp.float32)

    if reuse_down:
        # Down-projection only on the first N tile; carried across j.
        @pl.when(jnp.logical_and(j == 0, k == 0))
        def _():
            down_ref[...] = jnp.zeros_like(down_ref)

        @pl.when(j == 0)
        def _():
            down_ref[...] += lax.dot_general(x, a_ref[...], contract_last,
                                             preferred_element_type=jnp.float32)
    else:
        @pl.when(k == 0)
        def _():
            down_ref[...] = jnp.zeros_like(down_ref)

        down_ref[...] += lax.dot_general(x, a_ref[...], contract_last,
                                         preferred_element_type=jnp.float32)

    @pl.when(k == pl.num_programs(2) - 1)
    def _():
        # Scale the small (tm, rank) intermediate (cheap), one up-projection
        # per (i, j) tile.  NOTE: the cast to lora_B's dtype (bf16 serving
        # path) is a slight precision drop vs an all-f32 reference.
        down = (down_ref[...] * scaling).astype(bl_ref.dtype)
        up = lax.dot_general(down, bl_ref[...], contract_last,
                             preferred_element_type=jnp.float32)
        o_ref[...] = (acc_ref[...] + b_ref[...].astype(jnp.float32) + up
                      ).astype(o_ref.dtype)


def lora_linear(x, w, b, lora_A, lora_B, *, alpha=16, rank=8,
                tm=256, tn=256, tk=1024):
    """x: (batch, seq, in_f). w: (out_f, in_f), lora_A: (rank, in_f),
    lora_B: (out_f, rank). Returns (batch, seq, out_f)."""
    batch, seq, in_f = x.shape
    out_f = w.shape[0]
    scaling = float(alpha) / float(rank)
    M = batch * seq

    # Clamp tiles to the (padded) problem size, keeping TPU-friendly multiples.
    sub = _sublane_multiple(x.dtype)
    tm = min(tm, _round_up(M, sub))
    tn = min(tn, _round_up(out_f, 128))
    tk = min(tk, _round_up(in_f, 128))

    Mp = _round_up(M, tm)
    Np = _round_up(out_f, tn)
    Kp = _round_up(in_f, tk)

    # Zero padding is exact (padded K contributes 0, padded rows/cols are
    # sliced off).  For shapes already aligned to the tiles these pads are
    # no-ops; weights keep their native layout (no transpose copy).
    x2 = jnp.pad(x.reshape(M, in_f), ((0, Mp - M), (0, Kp - in_f)))
    wp = jnp.pad(w, ((0, Np - out_f), (0, Kp - in_f)))               # (Np, Kp)
    b2 = jnp.pad(b.reshape(1, out_f), ((0, 0), (0, Np - out_f)))     # (1, Np)
    ap = jnp.pad(lora_A, ((0, 0), (0, Kp - in_f)))                   # (rank, Kp)
    bp = jnp.pad(lora_B, ((0, Np - out_f), (0, 0)))                  # (Np, rank)

    n_i, n_j, n_k = Mp // tm, Np // tn, Kp // tk

    # Reuse the carried down-projection only when it saves work (n_j > 1) and
    # there are enough row tiles to keep both v7x TensorCores busy on i alone.
    reuse_down = (n_j > 1) and (n_i > 1)
    if reuse_down:
        dim_sem = ("parallel", "arbitrary", "arbitrary")
    else:
        dim_sem = ("parallel", "parallel", "arbitrary")

    kernel = functools.partial(_lora_linear_kernel, scaling=scaling,
                               reuse_down=reuse_down)

    itemsize = jnp.dtype(x.dtype).itemsize
    flops = 2.0 * M * (out_f * in_f + in_f * rank + rank * out_f)
    bytes_accessed = itemsize * (x2.size + wp.size + b2.size + ap.size
                                 + bp.size + Mp * Np)
    cost = pl.CostEstimate(flops=int(flops), transcendentals=0,
                           bytes_accessed=int(bytes_accessed))

    out2 = pl.pallas_call(
        kernel,
        out_shape=jax.ShapeDtypeStruct((Mp, Np), x.dtype),
        grid_spec=pltpu.PrefetchScalarGridSpec(
            num_scalar_prefetch=0,
            grid=(n_i, n_j, n_k),
            in_specs=[
                pl.BlockSpec((tm, tk), lambda i, j, k: (i, k)),    # x tile
                pl.BlockSpec((tn, tk), lambda i, j, k: (j, k)),    # W tile
                pl.BlockSpec((1, tn), lambda i, j, k: (0, j)),     # bias tile
                pl.BlockSpec((rank, tk), lambda i, j, k: (0, k)),  # A tile
                pl.BlockSpec((tn, rank), lambda i, j, k: (j, 0)),  # B tile
            ],
            out_specs=pl.BlockSpec((tm, tn), lambda i, j, k: (i, j)),
            scratch_shapes=[
                pltpu.VMEM((tm, tn), jnp.float32),    # base accumulator
                pltpu.VMEM((tm, rank), jnp.float32),  # LoRA down accumulator
            ],
        ),
        compiler_params=pltpu.CompilerParams(dimension_semantics=dim_sem),
        cost_estimate=cost,
    )(x2, wp, b2, ap, bp)

    return out2[:M, :out_f].reshape(batch, seq, out_f)


def lora_linear_ref(x, w, b, lora_A, lora_B, *, alpha=16, rank=8):
    scaling = float(alpha) / float(rank)
    xf = x.astype(jnp.float32)
    base = jnp.einsum("bsi,oi->bso", xf, w.astype(jnp.float32)) + b.astype(jnp.float32)
    down = jnp.einsum("bsi,ri->bsr", xf, lora_A.astype(jnp.float32))
    up = jnp.einsum("bsr,or->bso", down, lora_B.astype(jnp.float32))
    return base + up * scaling


def _make_params(key, batch, seq, in_f, out_f, rank, dtype=jnp.float32):
    kx, kw, kb, ka, kB = jax.random.split(key, 5)
    x = jax.random.normal(kx, (batch, seq, in_f), dtype=jnp.float32).astype(dtype)
    # Base nn.Linear weights + LoRA params (test_mode=True: lora_B non-zero so
    # the LoRA path is exercised).
    w = (jax.random.normal(kw, (out_f, in_f), dtype=jnp.float32) * 0.1).astype(dtype)
    b = (jax.random.normal(kb, (out_f,), dtype=jnp.float32) * 0.1).astype(dtype)
    lora_A = (jax.random.normal(ka, (rank, in_f), dtype=jnp.float32) * 0.02).astype(dtype)
    lora_B = (jax.random.normal(kB, (out_f, rank), dtype=jnp.float32) * 0.02).astype(dtype)
    return x, w, b, lora_A, lora_B


if __name__ == "__main__":
    key = jax.random.PRNGKey(0)
    k1, k2 = jax.random.split(key)
    rank, alpha = 8, 16

    # TODO(synk): dropout with p>0 (training mode) would need pltpu.prng_*; the
    # module default p=0.0 is the identity, so it is omitted here.

    # --- Test 1: small shapes matching the module defaults (single tile). ---
    x, w, b, lora_A, lora_B = _make_params(k1, 2, 8, 32, 32, rank)
    out = lora_linear(x, w, b, lora_A, lora_B, alpha=alpha, rank=rank)
    out = jax.block_until_ready(out)
    ref = lora_linear_ref(x, w, b, lora_A, lora_B, alpha=alpha, rank=rank)
    assert out.shape == (2, 8, 32)
    assert jnp.allclose(out, ref, atol=1e-4, rtol=1e-4), "f32 small mismatch"

    # --- Test 2: multi-tile grid, exercises the carried (j==0) down-proj. ---
    x, w, b, lora_A, lora_B = _make_params(k2, 2, 64, 256, 512, rank)
    out = lora_linear(x, w, b, lora_A, lora_B, alpha=alpha, rank=rank,
                      tm=64, tn=128, tk=128)
    out = jax.block_until_ready(out)
    ref = lora_linear_ref(x, w, b, lora_A, lora_B, alpha=alpha, rank=rank)
    assert out.shape == (2, 64, 512)
    assert jnp.allclose(out, ref, atol=1e-3, rtol=1e-3), "f32 multi-tile mismatch"

    # --- Test 3: bf16 serving path (f32 accumulation inside the kernel). ---
    xb, wb, bb, Ab, Bb = (a.astype(jnp.bfloat16) for a in (x, w, b, lora_A, lora_B))
    out_bf = lora_linear(xb, wb, bb, Ab, Bb, alpha=alpha, rank=rank,
                         tm=64, tn=128, tk=128)
    out_bf = jax.block_until_ready(out_bf)
    ref_bf = lora_linear_ref(xb, wb, bb, Ab, Bb, alpha=alpha, rank=rank)
    assert out_bf.shape == (2, 64, 512)
    assert jnp.allclose(out_bf.astype(jnp.float32), ref_bf, atol=1e-1, rtol=1e-1), \
        "bf16 mismatch"

    print("KERNEL_OK")
</pallas_src>

<mosaic_0001>
module attributes {stable_mosaic.version = 11 : i64} {
  func.func @_lora_linear_kernel(%arg0: i32, %arg1: i32, %arg2: i32, %arg3: memref<16x128xf32, #tpu.memory_space<vmem>>, %arg4: memref<128x128xf32, #tpu.memory_space<vmem>>, %arg5: memref<1x128xf32, #tpu.memory_space<vmem>>, %arg6: memref<8x128xf32, #tpu.memory_space<vmem>>, %arg7: memref<128x8xf32, #tpu.memory_space<vmem>>, %arg8: memref<16x128xf32, #tpu.memory_space<vmem>>, %arg9: memref<16x128xf32, #tpu.memory_space<vmem>>, %arg10: memref<16x8xf32, #tpu.memory_space<vmem>>) attributes {dimension_semantics = [#tpu.dimension_semantics<parallel>, #tpu.dimension_semantics<parallel>, #tpu.dimension_semantics<arbitrary>], iteration_bounds = array<i64: 1, 1, 1>, scalar_prefetch = 0 : i64, scratch_operands = 2 : i64, tpu.core_type = #tpu.core_type<tc>, window_params = [{transform_indices = @transform_0, window_bounds = array<i64: 16, 128>}, {transform_indices = @transform_1, window_bounds = array<i64: 128, 128>}, {transform_indices = @transform_2, window_bounds = array<i64: 1, 128>}, {transform_indices = @transform_3, window_bounds = array<i64: 8, 128>}, {transform_indices = @transform_4, window_bounds = array<i64: 128, 8>}, {transform_indices = @transform_5, window_bounds = array<i64: 16, 128>}]} {
    %c0_i32 = arith.constant 0 : i32
    %0 = arith.cmpi eq, %arg2, %c0_i32 : i32
    %1 = arith.extui %0 : i1 to i32
    %c0_i32_0 = arith.constant 0 : i32
    %2 = arith.cmpi ne, %1, %c0_i32_0 : i32
    scf.if %2 {
      %cst_19 = arith.constant 0.000000e+00 : f32
      %20 = vector.broadcast %cst_19 : f32 to vector<16x128xf32>
      %c0_20 = arith.constant 0 : index
      %c0_21 = arith.constant 0 : index
      %21 = vector.load %arg9[%c0_20, %c0_21] : memref<16x128xf32, #tpu.memory_space<vmem>>, vector<16x128xf32>
      tpu.vector_store %arg9[%c0_20, %c0_21], %20 {strides = array<i32>} : memref<16x128xf32, #tpu.memory_space<vmem>>, vector<16x128xf32>,
    } else {
    }
    %c0 = arith.constant 0 : index
    %c0_1 = arith.constant 0 : index
    %3 = vector.load %arg3[%c0, %c0_1] : memref<16x128xf32, #tpu.memory_space<vmem>>, vector<16x128xf32>
    %c0_2 = arith.constant 0 : index
    %c0_3 = arith.constant 0 : index
    %4 = vector.load %arg9[%c0_2, %c0_3] : memref<16x128xf32, #tpu.memory_space<vmem>>, vector<16x128xf32>
    %c0_4 = arith.constant 0 : index
    %c0_5 = arith.constant 0 : index
    %5 = vector.load %arg4[%c0_4, %c0_5] : memref<128x128xf32, #tpu.memory_space<vmem>>, vector<128x128xf32>
    %cst = arith.constant dense<0.000000e+00> : vector<16x128xf32>
    %6 = tpu.matmul %3, %5, %cst {dimension_numbers = #tpu.dot_dimension_numbers<[1], [1], [0], [0], [0, 0, 1, 0], [], []>} : vector<16x128xf32>, vector<128x128xf32>, vector<16x128xf32> -> vector<16x128xf32>
    %7 = arith.addf %4, %6 : vector<16x128xf32>
    %c0_6 = arith.constant 0 : index
    %c0_7 = arith.constant 0 : index
    %8 = vector.load %arg9[%c0_6, %c0_7] : memref<16x128xf32, #tpu.memory_space<vmem>>, vector<16x128xf32>
    tpu.vector_store %arg9[%c0_6, %c0_7], %7 {strides = array<i32>} : memref<16x128xf32, #tpu.memory_space<vmem>>, vector<16x128xf32>,
    %c0_i32_8 = arith.constant 0 : i32
    %9 = arith.cmpi eq, %arg2, %c0_i32_8 : i32
    %10 = arith.extui %9 : i1 to i32
    %c0_i32_9 = arith.constant 0 : i32
    %11 = arith.cmpi ne, %10, %c0_i32_9 : i32
    scf.if %11 {
      %cst_19 = arith.constant 0.000000e+00 : f32
      %20 = vector.broadcast %cst_19 : f32 to vector<16x8xf32>
      %c0_20 = arith.constant 0 : index
      %c0_21 = arith.constant 0 : index
      %21 = vector.load %arg10[%c0_20, %c0_21] : memref<16x8xf32, #tpu.memory_space<vmem>>, vector<16x8xf32>
      tpu.vector_store %arg10[%c0_20, %c0_21], %20 {strides = array<i32>} : memref<16x8xf32, #tpu.memory_space<vmem>>, vector<16x8xf32>,
    } else {
    }
    %c0_10 = arith.constant 0 : index
    %c0_11 = arith.constant 0 : index
    %12 = vector.load %arg10[%c0_10, %c0_11] : memref<16x8xf32, #tpu.memory_space<vmem>>, vector<16x8xf32>
    %c0_12 = arith.constant 0 : index
    %c0_13 = arith.constant 0 : index
    %13 = vector.load %arg6[%c0_12, %c0_13] : memref<8x128xf32, #tpu.memory_space<vmem>>, vector<8x128xf32>
    %cst_14 = arith.constant dense<0.000000e+00> : vector<16x8xf32>
    %14 = tpu.matmul %3, %13, %cst_14 {dimension_numbers = #tpu.dot_dimension_numbers<[1], [1], [0], [0], [0, 0, 1, 0], [], []>} : vector<16x128xf32>, vector<8x128xf32>, vector<16x8xf32> -> vector<16x8xf32>
    %15 = arith.addf %12, %14 : vector<16x8xf32>
    %c0_15 = arith.constant 0 : index
    %c0_16 = arith.constant 0 : index
    %16 = vector.load %arg10[%c0_15, %c0_16] : memref<16x8xf32, #tpu.memory_space<vmem>>, vector<16x8xf32>
    tpu.vector_store %arg10[%c0_15, %c0_16], %15 {strides = array<i32>} : memref<16x8xf32, #tpu.memory_space<vmem>>, vector<16x8xf32>,
    %c0_i32_17 = arith.constant 0 : i32
    %17 = arith.cmpi eq, %arg2, %c0_i32_17 : i32
    %18 = arith.extui %17 : i1 to i32
    %c0_i32_18 = arith.constant 0 : i32
    %19 = arith.cmpi ne, %18, %c0_i32_18 : i32
    scf.if %19 {
      %c0_19 = arith.constant 0 : index
      %c0_20 = arith.constant 0 : index
      %20 = vector.load %arg10[%c0_19, %c0_20] : memref<16x8xf32, #tpu.memory_space<vmem>>, vector<16x8xf32>
      %cst_21 = arith.constant 2.000000e+00 : f32
      %21 = vector.broadcast %cst_21 : f32 to vector<16x8xf32>
      %22 = arith.mulf %20, %21 : vector<16x8xf32>
      %c0_22 = arith.constant 0 : index
      %c0_23 = arith.constant 0 : index
      %23 = vector.load %arg7[%c0_22, %c0_23] : memref<128x8xf32, #tpu.memory_space<vmem>>, vector<128x8xf32>
      %cst_24 = arith.constant dense<0.000000e+00> : vector<16x128xf32>
      %24 = tpu.matmul %22, %23, %cst_24 {dimension_numbers = #tpu.dot_dimension_numbers<[1], [1], [0], [0], [0, 0, 1, 0], [], []>} : vector<16x8xf32>, vector<128x8xf32>, vector<16x128xf32> -> vector<16x128xf32>
      %c0_25 = arith.constant 0 : index
      %c0_26 = arith.constant 0 : index
      %25 = vector.load %arg9[%c0_25, %c0_26] : memref<16x128xf32, #tpu.memory_space<vmem>>, vector<16x128xf32>
      %c0_27 = arith.constant 0 : index
      %c0_28 = arith.constant 0 : index
      %26 = vector.load %arg5[%c0_27, %c0_28] : memref<1x128xf32, #tpu.memory_space<vmem>>, vector<1x128xf32>
      %27 = vector.broadcast %26 : vector<1x128xf32> to vector<16x128xf32>
      %28 = arith.addf %25, %27 : vector<16x128xf32>
      %29 = arith.addf %28, %24 : vector<16x128xf32>
      %c0_29 = arith.constant 0 : index
      %c0_30 = arith.constant 0 : index
      %30 = vector.load %arg8[%c0_29, %c0_30] : memref<16x128xf32, #tpu.memory_space<vmem>>, vector<16x128xf32>
      tpu.vector_store %arg8[%c0_29, %c0_30], %29 {strides = array<i32>} : memref<16x128xf32, #tpu.memory_space<vmem>>, vector<16x128xf32>,
    } else {
    }
    return
  }
  func.func @transform_0(%arg0: i32, %arg1: i32, %arg2: i32) -> (i32, i32) {
    %c0_i32 = arith.constant 0 : i32
    return %arg0, %arg2 : i32, i32
  }
  func.func @transform_1(%arg0: i32, %arg1: i32, %arg2: i32) -> (i32, i32) {
    %c0_i32 = arith.constant 0 : i32
    return %arg1, %arg2 : i32, i32
  }
  func.func @transform_2(%arg0: i32, %arg1: i32, %arg2: i32) -> (i32, i32) {
    %c0_i32 = arith.constant 0 : i32
    %c0_i32_0 = arith.constant 0 : i32
    return %c0_i32, %arg1 : i32, i32
  }
  func.func @transform_3(%arg0: i32, %arg1: i32, %arg2: i32) -> (i32, i32) {
    %c0_i32 = arith.constant 0 : i32
    %c0_i32_0 = arith.constant 0 : i32
    return %c0_i32, %arg2 : i32, i32
  }
  func.func @transform_4(%arg0: i32, %arg1: i32, %arg2: i32) -> (i32, i32) {
    %c0_i32 = arith.constant 0 : i32
    %c0_i32_0 = arith.constant 0 : i32
    return %arg1, %c0_i32 : i32, i32
  }
  func.func @transform_5(%arg0: i32, %arg1: i32, %arg2: i32) -> (i32, i32) {
    %c0_i32 = arith.constant 0 : i32
    return %arg0, %arg1 : i32, i32
  }
}

</mosaic_0001>

<llo_original>
// kernel: tpu_custom_call.1
$region0: #{tpu_custom_call.1}
  #allocation0 [shape = 'u32[]', space=smem, size = 0x4, offset = 0x4, fixed_abs, tag = 'smem constant byte address 0x4 - core index']
  #allocation1 [shape = 'u32[144,128]{1,0:T(1,128)}', space=vmem, size = 0x12000, scoped, tag = 'internal scratch']
  #allocation2 [shape = 'f32[16,128]{1,0:T(8,128)}', space=vmem, size = 0x2000, scoped, tag = 'scratch operand']
  #allocation3 [shape = 'f32[16,8]{1,0:T(8,128)}', space=vmem, size = 0x2000, scoped, tag = 'scratch operand']
  %s0 = inlined_call_operand.hbm [shape: f32[16,128], index: 0, kind: input, shape index: {}]
  %s1 = inlined_call_operand.vmem [shape: f32[128,128], index: 1, kind: input, shape index: {}]
  %s2 = inlined_call_operand.vmem [shape: f32[1,128], index: 2, kind: input, shape index: {}]
  %s3 = inlined_call_operand.vmem [shape: f32[8,128], index: 3, kind: input, shape index: {}]
  %s4 = inlined_call_operand.vmem [shape: f32[128,8], index: 4, kind: input, shape index: {}]
  %s5 = inlined_call_operand.hbm [shape: f32[16,128], index: 5, kind: output, shape index: {}]
  %s6 = sld [smem:[#allocation0]]
  $region46: #{tpu_custom_call.1} parent=0
    _
  %s8 = ssub.s32 1, %s6
  %s9 = scalar_select 0, %s8, %s6
  $region1: #{tpu_custom_call.1} parent=0
    #allocation4 [shape = 'u8[8192]{0}', space=vmem, size = 0x2000, scoped, tag = 'input window, operand 0, single buffered']
    #allocation5 [shape = 's32[1]{0}', space=sflag, size = 0x4, scoped, tag = 'scoped memory for tpu_custom_call.1']
    #allocation6 [shape = 's32[1]{0}', space=sflag, size = 0x4, scoped, tag = 'scoped memory for tpu_custom_call.1']
    #allocation7 [shape = 'u8[8192]{0}', space=vmem, size = 0x2000, scoped, tag = 'output window, operand 0, single buffered']
    %10 = vsyncpa [#allocation5], 0
    %11 = vsyncpa [#allocation6], 0
    // Predicated region
    $region2: #{tpu_custom_call.1} parent=1 // pred_check
      _
    $region3: #{tpu_custom_call.1} parent=1 // pred_check_branch
      %13 = sbr.rel (0) target = $region5
    $region4: #{tpu_custom_call.1} parent=1 // pred_region
      %s15 = ssub.s32 256, 256
      %16 = vsyncadd [#allocation5], %s15
      %s17 = sshll.u32 [#allocation4], 4
      %s18 = int_to_ptr.vmem [resolvable:$true] %s17
      %23 = dma.hbm_to_vmem [thread:$0]  %s0, 256, %s18, [#allocation5], 128, 128, 8
    $region5: #{tpu_custom_call.1} parent=1 // pred_fallthru
      _
    // Predicated region
    $region6: #{tpu_custom_call.1} parent=1 // pred_check
      _
    $region7: #{tpu_custom_call.1} parent=1 // pred_check_branch
      %25 = sbr.rel (0) target = $region9
    $region8: #{tpu_custom_call.1} parent=1 // pred_region
      _
    $region9: #{tpu_custom_call.1} parent=1 // pred_fallthru
      _
    // Predicated region
    $region10: #{tpu_custom_call.1} parent=1 // pred_check
      _
    $region11: #{tpu_custom_call.1} parent=1 // pred_check_branch
      %27 = sbr.rel (0) target = $region13
    $region12: #{tpu_custom_call.1} parent=1 // pred_region
      _
    $region13: #{tpu_custom_call.1} parent=1 // pred_fallthru
      _
    // Predicated region
    $region14: #{tpu_custom_call.1} parent=1 // pred_check
      _
    $region15: #{tpu_custom_call.1} parent=1 // pred_check_branch
      %29 = sbr.rel (0) target = $region17
    $region16: #{tpu_custom_call.1} parent=1 // pred_region
      _
    $region17: #{tpu_custom_call.1} parent=1 // pred_fallthru
      _
    // Predicated region
    $region18: #{tpu_custom_call.1} parent=1 // pred_check
      _
    $region19: #{tpu_custom_call.1} parent=1 // pred_check_branch
      %31 = sbr.rel (0) target = $region21
    $region20: #{tpu_custom_call.1} parent=1 // pred_region
      _
    $region21: #{tpu_custom_call.1} parent=1 // pred_fallthru
      _
    // Predicated region
    $region22: #{tpu_custom_call.1} parent=1 // pred_check
      _
    $region23: #{tpu_custom_call.1} parent=1 // pred_check_branch
      %33 = sbr.rel (0) target = $region25
    $region24: #{tpu_custom_call.1} parent=1 // pred_region
      %34 = dma.done [#allocation5], 256
    $region25: #{tpu_custom_call.1} parent=1 // pred_fallthru
      _
    %p35 = scmp.eq.s32.totalorder 0, 0
    // Predicated region
    $region26: #{tpu_custom_call.1} parent=1 // pred_check
      %p36 = pneg %p35
    $region27: #{tpu_custom_call.1} parent=1 // pred_check_branch
      %38 = sbr.rel (%p36) target = $region29
    $region28: #{tpu_custom_call.1} parent=1 // pred_region
      %39 = vst [vmem:[#allocation2] sm:$0xff] 0.0
      %40 = vst [vmem:[#allocation2 + $0x8] sm:$0xff] 0.0
    $region29: #{tpu_custom_call.1} parent=1 // pred_fallthru
      _
    %v41 = vld [vmem:[#allocation4] sm:$0xff]
    %v42 = vld [vmem:[#allocation4 + $0x8] sm:$0xff]
    %v43 = vld [vmem:[#allocation2] sm:$0xff]
    %v44 = vld [vmem:[#allocation2 + $0x8] sm:$0xff]
    %v45 = vld [vmem:[%s1] sm:$0xff]
    %v46 = vld [vmem:[%s1 + $0x8] sm:$0xff]
    %v47 = vld [vmem:[%s1 + $0x10] sm:$0xff]
    %v48 = vld [vmem:[%s1 + $0x18] sm:$0xff]
    %v49 = vld [vmem:[%s1 + $0x20] sm:$0xff]
    %v50 = vld [vmem:[%s1 + $0x28] sm:$0xff]
    %v51 = vld [vmem:[%s1 + $0x30] sm:$0xff]
    %v52 = vld [vmem:[%s1 + $0x38] sm:$0xff]
    %v53 = vld [vmem:[%s1 + $0x40] sm:$0xff]
    %v54 = vld [vmem:[%s1 + $0x48] sm:$0xff]
    %v55 = vld [vmem:[%s1 + $0x50] sm:$0xff]
    %v56 = vld [vmem:[%s1 + $0x58] sm:$0xff]
    %v57 = vld [vmem:[%s1 + $0x60] sm:$0xff]
    %v58 = vld [vmem:[%s1 + $0x68] sm:$0xff]
    %v59 = vld [vmem:[%s1 + $0x70] sm:$0xff]
    %v60 = vld [vmem:[%s1 + $0x78] sm:$0xff]
    %61 = vmatprep.subr.mxu0 0.0
    %62 = vmatpush1.xpose.msra.mxu0 %v45
    %63 = vmatprep.subr.mxu0 0.0
    %64 = vmatpush1.xpose.msra.mxu0 %v46
    %65 = vmatprep.subr.mxu0 0.0
    %66 = vmatpush1.xpose.msra.mxu0 %v47
    %67 = vmatprep.subr.mxu0 0.0
    %68 = vmatpush1.xpose.msra.mxu0 %v48
    %69 = vmatprep.subr.mxu0 0.0
    %70 = vmatpush1.xpose.msra.mxu0 %v49
    %71 = vmatprep.subr.mxu0 0.0
    %72 = vmatpush1.xpose.msra.mxu0 %v50
    %73 = vmatprep.subr.mxu0 0.0
    %74 = vmatpush1.xpose.msra.mxu0 %v51
    %75 = vmatprep.subr.mxu0 0.0
    %76 = vmatpush1.xpose.msra.mxu0 %v52
    %77 = vmatprep.subr.mxu0 0.0
    %78 = vmatpush1.xpose.msra.mxu0 %v53
    %79 = vmatprep.subr.mxu0 0.0
    %80 = vmatpush1.xpose.msra.mxu0 %v54
    %81 = vmatprep.subr.mxu0 0.0
    %82 = vmatpush1.xpose.msra.mxu0 %v55
    %83 = vmatprep.subr.mxu0 0.0
    %84 = vmatpush1.xpose.msra.mxu0 %v56
    %85 = vmatprep.subr.mxu0 0.0
    %86 = vmatpush1.xpose.msra.mxu0 %v57
    %87 = vmatprep.subr.mxu0 0.0
    %88 = vmatpush1.xpose.msra.mxu0 %v58
    %89 = vmatprep.subr.mxu0 0.0
    %90 = vmatpush1.xpose.msra.mxu0 %v59
    %91 = vmatprep.subr.mxu0 0.0
    %92 = vmatpush1.xpose.msra.mxu0 %v60
    %93 = vmatprep.subr.mxu0 0.0
    %94 = vmatpush1.xpose.msra.mxu0 0.0
    %95 = vmatprep.subr.mxu0 0.0
    %96 = vmatpush1.xpose.msra.mxu0 0.0
    %97 = vmatprep.subr.mxu0 0.0
    %98 = vmatpush1.xpose.msra.mxu0 0.0
    %99 = vmatprep.subr.mxu0 0.0
    %100 = vmatpush1.xpose.msra.mxu0 0.0
    %101 = vmatprep.subr.mxu0 0.0
    %102 = vmatpush1.xpose.msra.mxu0 0.0
    %103 = vmatprep.subr.mxu0 0.0
    %104 = vmatpush1.xpose.msra.mxu0 0.0
    %105 = vmatprep.subr.mxu0 0.0
    %106 = vmatpush1.xpose.msra.mxu0 0.0
    %107 = vmatprep.subr.mxu0 0.0
    %108 = vmatpush1.xpose.msra.mxu0 0.0
    %109 = vmatprep.subr.mxu0 0.0
    %110 = vmatpush1.xpose.msra.mxu0 0.0
    %111 = vmatprep.subr.mxu0 0.0
    %112 = vmatpush1.xpose.msra.mxu0 0.0
    %113 = vmatprep.subr.mxu0 0.0
    %114 = vmatpush1.xpose.msra.mxu0 0.0
    %115 = vmatprep.subr.mxu0 0.0
    %116 = vmatpush1.xpose.msra.mxu0 0.0
    %117 = vmatprep.subr.mxu0 0.0
    %118 = vmatpush1.xpose.msra.mxu0 0.0
    %119 = vmatprep.subr.mxu0 0.0
    %120 = vmatpush1.xpose.msra.mxu0 0.0
    %121 = vmatprep.subr.mxu0 0.0
    %122 = vmatpush1.xpose.msra.mxu0 0.0
    %123 = vmatprep.subr.mxu0 0.0
    %124 = vmatpush1.xpose.msra.mxu0 0.0
    %125 = vmatprep.mubr.f32.mxu0 0.0
    %126 = vmatmul.mubr.f32.gmra.mrb[0].mxu0 %v41
    %v127 = vpop.f32.mrb[0].mxu0
    %v128 = vadd.f32 0.0, %v127
    %v129 = vpop.f32.mrb[0].mxu0
    %130 = vmatprep.mubr.f32.mxu0 0.0
    %131 = vmatmul.mubr.f32.gmra.mrb[0].mxu0 %v42
    %v132 = vpop.f32.mrb[0].mxu0
    %v133 = vadd.f32 0.0, %v132
    %v134 = vpop.f32.mrb[0].mxu0
    %135 = vdwg.mxu0
    %v136 = vadd.f32 %v43, %v128
    %v137 = vadd.f32 %v44, %v133
    %138 = vst [vmem:[#allocation2] sm:$0xff] %v136
    %139 = vst [vmem:[#allocation2 + $0x8] sm:$0xff] %v137
    // Predicated region
    $region30: #{tpu_custom_call.1} parent=1 // pred_check
      %p140 = pneg %p35
    $region31: #{tpu_custom_call.1} parent=1 // pred_check_branch
      %142 = sbr.rel (%p140) target = $region33
    $region32: #{tpu_custom_call.1} parent=1 // pred_region
      %vm143 = vcmask 64512
      %144 = vst.msk [vmem:[#allocation3] sm:$0xff] %vm143, 0.0
      %145 = vst.msk [vmem:[#allocation3 + $0x8] sm:$0xff] %vm143, 0.0
    $region33: #{tpu_custom_call.1} parent=1 // pred_fallthru
      _
    %v146 = vld [vmem:[#allocation3] sm:$0xff]
    %v147 = vld [vmem:[#allocation3 + $0x8] sm:$0xff]
    %v148 = vld [vmem:[%s3] sm:$0xff]
    %149 = vmatprep.subr.mxu0 0.0
    %150 = vmatpush1.xpose.msra.mxu0 %v148
    %151 = vmatprep.subr.mxu0 0.0
    %152 = vmatpush1.xpose.msra.mxu0 0.0
    %153 = vmatprep.subr.mxu0 0.0
    %154 = vmatpush1.xpose.msra.mxu0 0.0
    %155 = vmatprep.subr.mxu0 0.0
    %156 = vmatpush1.xpose.msra.mxu0 0.0
    %157 = vmatprep.subr.mxu0 0.0
    %158 = vmatpush1.xpose.msra.mxu0 0.0
    %159 = vmatprep.subr.mxu0 0.0
    %160 = vmatpush1.xpose.msra.mxu0 0.0
    %161 = vmatprep.subr.mxu0 0.0
    %162 = vmatpush1.xpose.msra.mxu0 0.0
    %163 = vmatprep.subr.mxu0 0.0
    %164 = vmatpush1.xpose.msra.mxu0 0.0
    %165 = vmatprep.subr.mxu0 0.0
    %166 = vmatpush1.xpose.msra.mxu0 0.0
    %167 = vmatprep.subr.mxu0 0.0
    %168 = vmatpush1.xpose.msra.mxu0 0.0
    %169 = vmatprep.subr.mxu0 0.0
    %170 = vmatpush1.xpose.msra.mxu0 0.0
    %171 = vmatprep.subr.mxu0 0.0
    %172 = vmatpush1.xpose.msra.mxu0 0.0
    %173 = vmatprep.subr.mxu0 0.0
    %174 = vmatpush1.xpose.msra.mxu0 0.0
    %175 = vmatprep.subr.mxu0 0.0
    %176 = vmatpush1.xpose.msra.mxu0 0.0
    %177 = vmatprep.subr.mxu0 0.0
    %178 = vmatpush1.xpose.msra.mxu0 0.0
    %179 = vmatprep.subr.mxu0 0.0
    %180 = vmatpush1.xpose.msra.mxu0 0.0
    %181 = vmatprep.subr.mxu0 0.0
    %182 = vmatpush1.xpose.msra.mxu0 0.0
    %183 = vmatprep.subr.mxu0 0.0
    %184 = vmatpush1.xpose.msra.mxu0 0.0
    %185 = vmatprep.subr.mxu0 0.0
    %186 = vmatpush1.xpose.msra.mxu0 0.0
    %187 = vmatprep.subr.mxu0 0.0
    %188 = vmatpush1.xpose.msra.mxu0 0.0
    %189 = vmatprep.subr.mxu0 0.0
    %190 = vmatpush1.xpose.msra.mxu0 0.0
    %191 = vmatprep.subr.mxu0 0.0
    %192 = vmatpush1.xpose.msra.mxu0 0.0
    %193 = vmatprep.subr.mxu0 0.0
    %194 = vmatpush1.xpose.msra.mxu0 0.0
    %195 = vmatprep.subr.mxu0 0.0
    %196 = vmatpush1.xpose.msra.mxu0 0.0
    %197 = vmatprep.subr.mxu0 0.0
    %198 = vmatpush1.xpose.msra.mxu0 0.0
    %199 = vmatprep.subr.mxu0 0.0
    %200 = vmatpush1.xpose.msra.mxu0 0.0
    %201 = vmatprep.subr.mxu0 0.0
    %202 = vmatpush1.xpose.msra.mxu0 0.0
    %203 = vmatprep.subr.mxu0 0.0
    %204 = vmatpush1.xpose.msra.mxu0 0.0
    %205 = vmatprep.subr.mxu0 0.0
    %206 = vmatpush1.xpose.msra.mxu0 0.0
    %207 = vmatprep.subr.mxu0 0.0
    %208 = vmatpush1.xpose.msra.mxu0 0.0
    %209 = vmatprep.subr.mxu0 0.0
    %210 = vmatpush1.xpose.msra.mxu0 0.0
    %211 = vmatprep.subr.mxu0 0.0
    %212 = vmatpush1.xpose.msra.mxu0 0.0
    %213 = vmatprep.mubr.f32.mxu0 0.0
    %214 = vmatmul.mubr.f32.gmra.mrb[0].mxu0 %v41
    %v215 = vpop.f32.mrb[0].mxu0
    %v216 = vadd.f32 0.0, %v215
    %v217 = vpop.f32.mrb[0].mxu0
    %218 = vmatprep.mubr.f32.mxu0 0.0
    %219 = vmatmul.mubr.f32.gmra.mrb[0].mxu0 %v42
    %v220 = vpop.f32.mrb[0].mxu0
    %v221 = vadd.f32 0.0, %v220
    %v222 = vpop.f32.mrb[0].mxu0
    %223 = vdwg.mxu0
    %v224 = vadd.f32 %v146, %v216
    %v225 = vadd.f32 %v147, %v221
    %vm226 = vcmask 64512
    %227 = vst.msk [vmem:[#allocation3] sm:$0xff] %vm226, %v224
    %228 = vst.msk [vmem:[#allocation3 + $0x8] sm:$0xff] %vm226, %v225
    // Predicated region
    $region34: #{tpu_custom_call.1} parent=1 // pred_check
      %p229 = pneg %p35
    $region35: #{tpu_custom_call.1} parent=1 // pred_check_branch
      %231 = sbr.rel (%p229) target = $region37
    $region36: #{tpu_custom_call.1} parent=1 // pred_region
      %v232 = vld [vmem:[#allocation3] sm:$0xff]
      %v233 = vld [vmem:[#allocation3 + $0x8] sm:$0xff]
      %v234 = vmul.f32 %v232, 2.0
      %v235 = vmul.f32 %v233, 2.0
      %v236 = vld [vmem:[%s4] sm:$0xff]
      %v237 = vld [vmem:[%s4 + $0x8] sm:$0xff]
      %v238 = vld [vmem:[%s4 + $0x10] sm:$0xff]
      %v239 = vld [vmem:[%s4 + $0x18] sm:$0xff]
      %v240 = vld [vmem:[%s4 + $0x20] sm:$0xff]
      %v241 = vld [vmem:[%s4 + $0x28] sm:$0xff]
      %v242 = vld [vmem:[%s4 + $0x30] sm:$0xff]
      %v243 = vld [vmem:[%s4 + $0x38] sm:$0xff]
      %v244 = vld [vmem:[%s4 + $0x40] sm:$0xff]
      %v245 = vld [vmem:[%s4 + $0x48] sm:$0xff]
      %v246 = vld [vmem:[%s4 + $0x50] sm:$0xff]
      %v247 = vld [vmem:[%s4 + $0x58] sm:$0xff]
      %v248 = vld [vmem:[%s4 + $0x60] sm:$0xff]
      %v249 = vld [vmem:[%s4 + $0x68] sm:$0xff]
      %v250 = vld [vmem:[%s4 + $0x70] sm:$0xff]
      %v251 = vld [vmem:[%s4 + $0x78] sm:$0xff]
      %v253 = vsel %vm226, %v234, 0
      %v256 = vsel %vm226, %v235, 0
      %v259 = vsel %vm226, %v236, 0
      %v262 = vsel %vm226, %v237, 0
      %v265 = vsel %vm226, %v238, 0
      %v268 = vsel %vm226, %v239, 0
      %v271 = vsel %vm226, %v240, 0
      %v274 = vsel %vm226, %v241, 0
      %v277 = vsel %vm226, %v242, 0
      %v280 = vsel %vm226, %v243, 0
      %v283 = vsel %vm226, %v244, 0
      %v286 = vsel %vm226, %v245, 0
      %v289 = vsel %vm226, %v246, 0
      %v292 = vsel %vm226, %v247, 0
      %v295 = vsel %vm226, %v248, 0
      %v298 = vsel %vm226, %v249, 0
      %v301 = vsel %vm226, %v250, 0
      %v304 = vsel %vm226, %v251, 0
      %306 = vmatprep.subr.mxu0 0.0
      %307 = vmatpush1.xpose.msra.mxu0 %v259
      %308 = vmatprep.subr.mxu0 0.0
      %309 = vmatpush1.xpose.msra.mxu0 %v262
      %310 = vmatprep.subr.mxu0 0.0
      %311 = vmatpush1.xpose.msra.mxu0 %v265
      %312 = vmatprep.subr.mxu0 0.0
      %313 = vmatpush1.xpose.msra.mxu0 %v268
      %314 = vmatprep.subr.mxu0 0.0
      %315 = vmatpush1.xpose.msra.mxu0 %v271
      %316 = vmatprep.subr.mxu0 0.0
      %317 = vmatpush1.xpose.msra.mxu0 %v274
      %318 = vmatprep.subr.mxu0 0.0
      %319 = vmatpush1.xpose.msra.mxu0 %v277
      %320 = vmatprep.subr.mxu0 0.0
      %321 = vmatpush1.xpose.msra.mxu0 %v280
      %322 = vmatprep.subr.mxu0 0.0
      %323 = vmatpush1.xpose.msra.mxu0 %v283
      %324 = vmatprep.subr.mxu0 0.0
      %325 = vmatpush1.xpose.msra.mxu0 %v286
      %326 = vmatprep.subr.mxu0 0.0
      %327 = vmatpush1.xpose.msra.mxu0 %v289
      %328 = vmatprep.subr.mxu0 0.0
      %329 = vmatpush1.xpose.msra.mxu0 %v292
      %330 = vmatprep.subr.mxu0 0.0
      %331 = vmatpush1.xpose.msra.mxu0 %v295
      %332 = vmatprep.subr.mxu0 0.0
      %333 = vmatpush1.xpose.msra.mxu0 %v298
      %334 = vmatprep.subr.mxu0 0.0
      %335 = vmatpush1.xpose.msra.mxu0 %v301
      %336 = vmatprep.subr.mxu0 0.0
      %337 = vmatpush1.xpose.msra.mxu0 %v304
      %338 = vmatprep.subr.mxu0 0.0
      %339 = vmatpush1.xpose.msra.mxu0 0.0
      %340 = vmatprep.subr.mxu0 0.0
      %341 = vmatpush1.xpose.msra.mxu0 0.0
      %342 = vmatprep.subr.mxu0 0.0
      %343 = vmatpush1.xpose.msra.mxu0 0.0
      %344 = vmatprep.subr.mxu0 0.0
      %345 = vmatpush1.xpose.msra.mxu0 0.0
      %346 = vmatprep.subr.mxu0 0.0
      %347 = vmatpush1.xpose.msra.mxu0 0.0
      %348 = vmatprep.subr.mxu0 0.0
      %349 = vmatpush1.xpose.msra.mxu0 0.0
      %350 = vmatprep.subr.mxu0 0.0
      %351 = vmatpush1.xpose.msra.mxu0 0.0
      %352 = vmatprep.subr.mxu0 0.0
      %353 = vmatpush1.xpose.msra.mxu0 0.0
      %354 = vmatprep.subr.mxu0 0.0
      %355 = vmatpush1.xpose.msra.mxu0 0.0
      %356 = vmatprep.subr.mxu0 0.0
      %357 = vmatpush1.xpose.msra.mxu0 0.0
      %358 = vmatprep.subr.mxu0 0.0
      %359 = vmatpush1.xpose.msra.mxu0 0.0
      %360 = vmatprep.subr.mxu0 0.0
      %361 = vmatpush1.xpose.msra.mxu0 0.0
      %362 = vmatprep.subr.mxu0 0.0
      %363 = vmatpush1.xpose.msra.mxu0 0.0
      %364 = vmatprep.subr.mxu0 0.0
      %365 = vmatpush1.xpose.msra.mxu0 0.0
      %366 = vmatprep.subr.mxu0 0.0
      %367 = vmatpush1.xpose.msra.mxu0 0.0
      %368 = vmatprep.subr.mxu0 0.0
      %369 = vmatpush1.xpose.msra.mxu0 0.0
      %370 = vmatprep.mubr.f32.mxu0 0.0
      %371 = vmatmul.mubr.f32.gmra.mrb[0].mxu0 %v253
      %v372 = vpop.f32.mrb[0].mxu0
      %v373 = vadd.f32 0.0, %v372
      %v374 = vpop.f32.mrb[0].mxu0
      %375 = vmatprep.mubr.f32.mxu0 0.0
      %376 = vmatmul.mubr.f32.gmra.mrb[0].mxu0 %v256
      %v377 = vpop.f32.mrb[0].mxu0
      %v378 = vadd.f32 0.0, %v377
      %v379 = vpop.f32.mrb[0].mxu0
      %380 = vdwg.mxu0
      %v381 = vld [vmem:[#allocation2] sm:$0xff]
      %v382 = vld [vmem:[#allocation2 + $0x8] sm:$0xff]
      %v383 = vld [vmem:[%s2] sm:$0x1]
      %v385 = vlaneseq
      %v386 = vshrl.u32 %v385, 7
      %v387 = vsub.s32 0, %v386
      %v388 = vrot.slane %v383, %v387
      %v390 = vadd.f32 %v381, %v388
      %v391 = vadd.f32 %v382, %v388
      %v392 = vadd.f32 %v390, %v373
      %v393 = vadd.f32 %v391, %v378
      %394 = vst [vmem:[#allocation7] sm:$0xff] %v392
      %395 = vst [vmem:[#allocation7 + $0x8] sm:$0xff] %v393
    $region37: #{tpu_custom_call.1} parent=1 // pred_fallthru
      _
    // Predicated region
    $region38: #{tpu_custom_call.1} parent=1 // pred_check
      _
    $region39: #{tpu_custom_call.1} parent=1 // pred_check_branch
      %397 = sbr.rel (0) target = $region41
    $region40: #{tpu_custom_call.1} parent=1 // pred_region
      %s399 = ssub.s32 256, 256
      %400 = vsyncadd [#allocation6], %s399
      %s401 = sshll.u32 [#allocation7], 4
      %s402 = int_to_ptr.vmem [resolvable:$true] %s401
      %407 = dma.vmem_to_hbm [thread:$0]  %s402, 256, %s5, [#allocation6], 128, 128, 8
    $region41: #{tpu_custom_call.1} parent=1 // pred_fallthru
      _
    // Predicated region
    $region42: #{tpu_custom_call.1} parent=1 // pred_check
      _
    $region43: #{tpu_custom_call.1} parent=1 // pred_check_branch
      %409 = sbr.rel (0) target = $region45
    $region44: #{tpu_custom_call.1} parent=1 // pred_region
      %410 = dma.done [#allocation6], 256
    $region45: #{tpu_custom_call.1} parent=1 // pred_fallthru
      _
    %411 = vsyncpa [#allocation5], 1
    %412 = vsyncpa [#allocation6], 1

</llo_original>
